<compile_context>
chip_gen: v5e
topology: v5e:2x2
jax: 0.10.0
libtpu: 0.0.40
codegen_flags: <defaults>
</compile_context>

<pallas_src>
import functools

import jax
import jax.numpy as jnp
from jax.experimental import pallas as pl
from jax.experimental.pallas import tpu as pltpu


def _round_up(x: int, m: int) -> int:
    return ((x + m - 1) // m) * m


def classifier_head_kernel(x_ref, w_ref, b_ref, o_ref, acc_ref):
    # x_ref: [tm, tk] bf16, w_ref: [tk, tn] bf16, b_ref: [1, tn] f32,
    # o_ref: [tm, tn] f32, acc_ref: [tm, tn] f32 scratch (persists over k)
    k = pl.program_id(2)

    @pl.when(k == 0)
    def _():
        acc_ref[...] = jnp.zeros_like(acc_ref)

    acc_ref[...] += jnp.dot(
        x_ref[...], w_ref[...], preferred_element_type=jnp.float32
    )

    @pl.when(k == pl.num_programs(2) - 1)
    def _():
        # bias_eff already contains the (sent_label_mask - 1) * 1e10 penalty.
        o_ref[...] = (acc_ref[...] + b_ref[...]).astype(o_ref.dtype)


@functools.partial(jax.jit, static_argnames=("tm", "tn", "tk"))
def classifier_head(seq_feats, weight, bias, sent_label_mask,
                    *, tm=256, tn=256, tk=512):
    """seq_feats: [B, H]; weight: [H, C]; bias: [C]; sent_label_mask: [C].

    Returns f32 logits [B, C] = seq_feats @ weight + bias + (mask - 1) * 1e10.
    """
    B, H = seq_feats.shape
    H2, C = weight.shape
    assert H == H2

    # Fold the label-mask penalty into the bias (one O(C) op in XLA instead of
    # O(B*C) per tile in-kernel, and one less input stream).
    bias_eff = bias.astype(jnp.float32) + \
        (sent_label_mask.astype(jnp.float32) - 1.0) * 1.0e10

    # Clamp tile sizes to the (aligned) problem size, then pad to tile multiples
    # so every grid block is full and lane-dense (last dims multiples of 128).
    tm = min(tm, _round_up(B, 8))
    tn = min(tn, _round_up(C, 128))
    tk = min(tk, _round_up(H, 128))
    Bp = _round_up(B, tm)
    Cp = _round_up(C, tn)
    Hp = _round_up(H, tk)

    x = seq_feats.astype(jnp.bfloat16)
    w = weight.astype(jnp.bfloat16)
    if (Bp, Hp) != (B, H):
        x = jnp.pad(x, ((0, Bp - B), (0, Hp - H)))
    if (Hp, Cp) != (H, C):
        w = jnp.pad(w, ((0, Hp - H), (0, Cp - C)))
    b2 = bias_eff.reshape(1, C)
    if Cp != C:
        b2 = jnp.pad(b2, ((0, 0), (0, Cp - C)))

    grid = (Bp // tm, Cp // tn, Hp // tk)

    cost = pl.CostEstimate(
        flops=2 * Bp * Hp * Cp,
        transcendentals=0,
        bytes_accessed=Bp * Hp * 2 + Hp * Cp * 2 + Cp * 4 + Bp * Cp * 4,
    )

    out_padded = pl.pallas_call(
        classifier_head_kernel,
        out_shape=jax.ShapeDtypeStruct((Bp, Cp), jnp.float32),
        grid_spec=pltpu.PrefetchScalarGridSpec(
            num_scalar_prefetch=0,
            grid=grid,
            in_specs=[
                pl.BlockSpec((tm, tk), lambda i, j, k: (i, k)),   # x
                pl.BlockSpec((tk, tn), lambda i, j, k: (k, j)),   # W
                pl.BlockSpec((1, tn), lambda i, j, k: (0, j)),    # bias_eff
            ],
            out_specs=pl.BlockSpec((tm, tn), lambda i, j, k: (i, j)),
            scratch_shapes=[pltpu.VMEM((tm, tn), jnp.float32)],
        ),
        compiler_params=pltpu.CompilerParams(
            dimension_semantics=("parallel", "parallel", "arbitrary"),
        ),
        cost_estimate=cost,
    )(x, w, b2)

    return out_padded[:B, :C]


def make_params(key, hidden_dim, n_classes, sent_labels=None):
    """Deterministic synthetic parameters matching nn.Linear(hidden_dim, n_classes)."""
    kw, kb = jax.random.split(key)
    # nn.Linear default init: U(-1/sqrt(H), 1/sqrt(H)); stored here as [H, C]
    bound = 1.0 / jnp.sqrt(jnp.float32(hidden_dim))
    weight = jax.random.uniform(kw, (hidden_dim, n_classes), jnp.float32, -bound, bound)
    bias = jax.random.uniform(kb, (n_classes,), jnp.float32, -bound, bound)
    if sent_labels is None:
        sent_label_mask = jnp.ones((n_classes,), jnp.float32)
    else:
        sent_label_mask = jnp.zeros((n_classes,), jnp.float32).at[
            jnp.asarray(sent_labels)
        ].set(1.0)
    return weight, bias, sent_label_mask


if __name__ == "__main__":
    key = jax.random.PRNGKey(0)
    k_feat, k_param = jax.random.split(key)

    batch, hidden_dim, n_classes = 8, 32, 16
    sent_labels = [0, 2, 5, 11]

    seq_feats = jax.random.normal(k_feat, (batch, hidden_dim), jnp.float32)
    weight, bias, sent_label_mask = make_params(
        k_param, hidden_dim, n_classes, sent_labels
    )

    logits = classifier_head(seq_feats, weight, bias, sent_label_mask)
    jax.block_until_ready(logits)

    # Reference in plain JAX, quantizing x/W to bf16 to match the kernel's
    # bf16-input / f32-accumulate matmul.
    x_q = seq_feats.astype(jnp.bfloat16).astype(jnp.float32)
    w_q = weight.astype(jnp.bfloat16).astype(jnp.float32)
    ref = x_q @ w_q + bias[None, :] + (sent_label_mask[None, :] - 1.0) * 1.0e10

    assert logits.shape == (batch, n_classes)
    assert logits.dtype == jnp.float32
    assert jnp.allclose(logits, ref, rtol=1e-3, atol=1e-2)

    print("KERNEL_OK")
</pallas_src>

<mosaic_0001>
module attributes {stable_mosaic.version = 11 : i64} {
  func.func @classifier_head_kernel(%arg0: i32, %arg1: i32, %arg2: i32, %arg3: memref<8x128xbf16, #tpu.memory_space<vmem>>, %arg4: memref<128x128xbf16, #tpu.memory_space<vmem>>, %arg5: memref<1x128xf32, #tpu.memory_space<vmem>>, %arg6: memref<8x128xf32, #tpu.memory_space<vmem>>, %arg7: memref<8x128xf32, #tpu.memory_space<vmem>>) attributes {dimension_semantics = [#tpu.dimension_semantics<parallel>, #tpu.dimension_semantics<parallel>, #tpu.dimension_semantics<arbitrary>], iteration_bounds = array<i64: 1, 1, 1>, scalar_prefetch = 0 : i64, scratch_operands = 1 : i64, tpu.core_type = #tpu.core_type<tc>, window_params = [{transform_indices = @transform_0, window_bounds = array<i64: 8, 128>}, {transform_indices = @transform_1, window_bounds = array<i64: 128, 128>}, {transform_indices = @transform_2, window_bounds = array<i64: 1, 128>}, {transform_indices = @transform_3, window_bounds = array<i64: 8, 128>}]} {
    %c0_i32 = arith.constant 0 : i32
    %0 = arith.cmpi eq, %arg2, %c0_i32 : i32
    %1 = arith.extui %0 : i1 to i32
    %c0_i32_0 = arith.constant 0 : i32
    %2 = arith.cmpi ne, %1, %c0_i32_0 : i32
    scf.if %2 {
      %cst_10 = arith.constant 0.000000e+00 : f32
      %12 = vector.broadcast %cst_10 : f32 to vector<8x128xf32>
      %c0_11 = arith.constant 0 : index
      %c0_12 = arith.constant 0 : index
      %13 = vector.load %arg7[%c0_11, %c0_12] : memref<8x128xf32, #tpu.memory_space<vmem>>, vector<8x128xf32>
      tpu.vector_store %arg7[%c0_11, %c0_12], %12 {strides = array<i32>} : memref<8x128xf32, #tpu.memory_space<vmem>>, vector<8x128xf32>,
    } else {
    }
    %c0 = arith.constant 0 : index
    %c0_1 = arith.constant 0 : index
    %3 = vector.load %arg7[%c0, %c0_1] : memref<8x128xf32, #tpu.memory_space<vmem>>, vector<8x128xf32>
    %c0_2 = arith.constant 0 : index
    %c0_3 = arith.constant 0 : index
    %4 = vector.load %arg3[%c0_2, %c0_3] : memref<8x128xbf16, #tpu.memory_space<vmem>>, vector<8x128xbf16>
    %c0_4 = arith.constant 0 : index
    %c0_5 = arith.constant 0 : index
    %5 = vector.load %arg4[%c0_4, %c0_5] : memref<128x128xbf16, #tpu.memory_space<vmem>>, vector<128x128xbf16>
    %cst = arith.constant dense<0.000000e+00> : vector<8x128xf32>
    %6 = tpu.matmul %4, %5, %cst {dimension_numbers = #tpu.dot_dimension_numbers<[1], [0], [0], [1], [0, 0, 1, 1], [], []>} : vector<8x128xbf16>, vector<128x128xbf16>, vector<8x128xf32> -> vector<8x128xf32>
    %7 = arith.addf %3, %6 : vector<8x128xf32>
    %c0_6 = arith.constant 0 : index
    %c0_7 = arith.constant 0 : index
    %8 = vector.load %arg7[%c0_6, %c0_7] : memref<8x128xf32, #tpu.memory_space<vmem>>, vector<8x128xf32>
    tpu.vector_store %arg7[%c0_6, %c0_7], %7 {strides = array<i32>} : memref<8x128xf32, #tpu.memory_space<vmem>>, vector<8x128xf32>,
    %c0_i32_8 = arith.constant 0 : i32
    %9 = arith.cmpi eq, %arg2, %c0_i32_8 : i32
    %10 = arith.extui %9 : i1 to i32
    %c0_i32_9 = arith.constant 0 : i32
    %11 = arith.cmpi ne, %10, %c0_i32_9 : i32
    scf.if %11 {
      %c0_10 = arith.constant 0 : index
      %c0_11 = arith.constant 0 : index
      %12 = vector.load %arg7[%c0_10, %c0_11] : memref<8x128xf32, #tpu.memory_space<vmem>>, vector<8x128xf32>
      %c0_12 = arith.constant 0 : index
      %c0_13 = arith.constant 0 : index
      %13 = vector.load %arg5[%c0_12, %c0_13] : memref<1x128xf32, #tpu.memory_space<vmem>>, vector<1x128xf32>
      %14 = vector.broadcast %13 : vector<1x128xf32> to vector<8x128xf32>
      %15 = arith.addf %12, %14 : vector<8x128xf32>
      %c0_14 = arith.constant 0 : index
      %c0_15 = arith.constant 0 : index
      %16 = vector.load %arg6[%c0_14, %c0_15] : memref<8x128xf32, #tpu.memory_space<vmem>>, vector<8x128xf32>
      tpu.vector_store %arg6[%c0_14, %c0_15], %15 {strides = array<i32>} : memref<8x128xf32, #tpu.memory_space<vmem>>, vector<8x128xf32>,
    } else {
    }
    return
  }
  func.func @transform_0(%arg0: i32, %arg1: i32, %arg2: i32) -> (i32, i32) {
    %c0_i32 = arith.constant 0 : i32
    return %arg0, %arg2 : i32, i32
  }
  func.func @transform_1(%arg0: i32, %arg1: i32, %arg2: i32) -> (i32, i32) {
    %c0_i32 = arith.constant 0 : i32
    return %arg2, %arg1 : i32, i32
  }
  func.func @transform_2(%arg0: i32, %arg1: i32, %arg2: i32) -> (i32, i32) {
    %c0_i32 = arith.constant 0 : i32
    %c0_i32_0 = arith.constant 0 : i32
    return %c0_i32, %arg1 : i32, i32
  }
  func.func @transform_3(%arg0: i32, %arg1: i32, %arg2: i32) -> (i32, i32) {
    %c0_i32 = arith.constant 0 : i32
    return %arg0, %arg1 : i32, i32
  }
}

</mosaic_0001>

<llo_original>
// kernel: classifier_head.1
$region0: #{classifier_head.1}
  #allocation0 [shape = 'u32[]', space=smem, size = 0x4, offset = 0x4, fixed_abs, tag = 'smem constant byte address 0x4 - core index']
  #allocation1 [shape = 'u32[72,128]{1,0:T(1,128)}', space=vmem, size = 0x9000, scoped, tag = 'internal scratch']
  #allocation2 [shape = 'f32[8,128]{1,0:T(8,128)}', space=vmem, size = 0x1000, scoped, tag = 'scratch operand']
  %s0 = inlined_call_operand.vmem [shape: bf16[8,128], index: 0, kind: input, shape index: {}]
  %s1 = inlined_call_operand.vmem [shape: bf16[128,128], index: 1, kind: input, shape index: {}]
  %s2 = inlined_call_operand.vmem [shape: f32[1,128], index: 2, kind: input, shape index: {}]
  %s3 = inlined_call_operand.hbm [shape: f32[8,128], index: 3, kind: output, shape index: {}]
  %s4 = sld [smem:[#allocation0]]
  $region30: #{classifier_head.1} parent=0
    _
  %s6 = ssub.s32 1, %s4
  %s7 = scalar_select 0, %s6, %s4
  $region1: #{classifier_head.1} parent=0
    #allocation3 [shape = 'u8[4096]{0}', space=vmem, size = 0x1000, scoped, tag = 'output window, operand 0, single buffered']
    #allocation4 [shape = 's32[1]{0}', space=sflag, size = 0x4, scoped, tag = 'scoped memory for classifier_head.1']
    %8 = vsyncpa [#allocation4], 0
    // Predicated region
    $region2: #{classifier_head.1} parent=1 // pred_check
      _
    $region3: #{classifier_head.1} parent=1 // pred_check_branch
      %10 = sbr.rel (0) target = $region5
    $region4: #{classifier_head.1} parent=1 // pred_region
      _
    $region5: #{classifier_head.1} parent=1 // pred_fallthru
      _
    // Predicated region
    $region6: #{classifier_head.1} parent=1 // pred_check
      _
    $region7: #{classifier_head.1} parent=1 // pred_check_branch
      %12 = sbr.rel (0) target = $region9
    $region8: #{classifier_head.1} parent=1 // pred_region
      _
    $region9: #{classifier_head.1} parent=1 // pred_fallthru
      _
    // Predicated region
    $region10: #{classifier_head.1} parent=1 // pred_check
      _
    $region11: #{classifier_head.1} parent=1 // pred_check_branch
      %14 = sbr.rel (0) target = $region13
    $region12: #{classifier_head.1} parent=1 // pred_region
      _
    $region13: #{classifier_head.1} parent=1 // pred_fallthru
      _
    %p15 = scmp.eq.s32.totalorder 0, 0
    // Predicated region
    $region14: #{classifier_head.1} parent=1 // pred_check
      %p16 = pneg %p15
    $region15: #{classifier_head.1} parent=1 // pred_check_branch
      %18 = sbr.rel (%p16) target = $region17
    $region16: #{classifier_head.1} parent=1 // pred_region
      %19 = vst [vmem:[#allocation2] sm:$0xff] 0.0
    $region17: #{classifier_head.1} parent=1 // pred_fallthru
      _
    %v20 = vld [vmem:[#allocation2] sm:$0xff]
    %v21 = vld [vmem:[%s0] sm:$0xf]
    %v22 = vld [vmem:[%s1] sm:$0xf]
    %v23 = vld [vmem:[%s1 + $0x4] sm:$0xf]
    %v24 = vld [vmem:[%s1 + $0x8] sm:$0xf]
    %v25 = vld [vmem:[%s1 + $0xc] sm:$0xf]
    %v26 = vld [vmem:[%s1 + $0x10] sm:$0xf]
    %v27 = vld [vmem:[%s1 + $0x14] sm:$0xf]
    %v28 = vld [vmem:[%s1 + $0x18] sm:$0xf]
    %v29 = vld [vmem:[%s1 + $0x1c] sm:$0xf]
    %v30 = vld [vmem:[%s1 + $0x20] sm:$0xf]
    %v31 = vld [vmem:[%s1 + $0x24] sm:$0xf]
    %v32 = vld [vmem:[%s1 + $0x28] sm:$0xf]
    %v33 = vld [vmem:[%s1 + $0x2c] sm:$0xf]
    %v34 = vld [vmem:[%s1 + $0x30] sm:$0xf]
    %v35 = vld [vmem:[%s1 + $0x34] sm:$0xf]
    %v36 = vld [vmem:[%s1 + $0x38] sm:$0xf]
    %v37 = vld [vmem:[%s1 + $0x3c] sm:$0xf]
    %v54 = vunpack.c.l.b16 %v22
    %v55 = vunpack.c.l.b16 %v23
    %v56 = vunpack.c.l.b16 %v24
    %v57 = vunpack.c.l.b16 %v25
    %v58 = vunpack.c.l.b16 %v26
    %v59 = vunpack.c.l.b16 %v27
    %v60 = vunpack.c.l.b16 %v28
    %v61 = vunpack.c.l.b16 %v29
    %v62 = vunpack.c.l.b16 %v30
    %v63 = vunpack.c.l.b16 %v31
    %v64 = vunpack.c.l.b16 %v32
    %v65 = vunpack.c.l.b16 %v33
    %v66 = vunpack.c.l.b16 %v34
    %v67 = vunpack.c.l.b16 %v35
    %v68 = vunpack.c.l.b16 %v36
    %v69 = vunpack.c.l.b16 %v37
    %v70 = vpack.c.b16 %v55, %v54
    %v71 = vpack.c.b16 %v57, %v56
    %v72 = vpack.c.b16 %v59, %v58
    %v73 = vpack.c.b16 %v61, %v60
    %v74 = vpack.c.b16 %v63, %v62
    %v75 = vpack.c.b16 %v65, %v64
    %v76 = vpack.c.b16 %v67, %v66
    %v77 = vpack.c.b16 %v69, %v68
    %86 = vmatpush.bf16.msra.mxu0 %v77
    %87 = vmatpush.bf16.msra.mxu0 %v76
    %88 = vmatpush.bf16.msra.mxu0 %v75
    %89 = vmatpush.bf16.msra.mxu0 %v74
    %90 = vmatpush.bf16.msra.mxu0 %v73
    %91 = vmatpush.bf16.msra.mxu0 %v72
    %92 = vmatpush.bf16.msra.mxu0 %v71
    %93 = vmatpush.bf16.msra.mxu0 %v70
    %94 = vmatmul.bf16.gmra.mxu0 %v21
    %v95 = vpop.f32.mrf.mxu0
    %v96 = vadd.f32 0.0, %v95
    %v97 = vpop.f32.mrf.mxu0
    %98 = vdwg.mxu0
    %v99 = vadd.f32 %v20, %v96
    %100 = vst [vmem:[#allocation2] sm:$0xff] %v99
    // Predicated region
    $region18: #{classifier_head.1} parent=1 // pred_check
      %p101 = pneg %p15
    $region19: #{classifier_head.1} parent=1 // pred_check_branch
      %103 = sbr.rel (%p101) target = $region21
    $region20: #{classifier_head.1} parent=1 // pred_region
      %v104 = vld [vmem:[#allocation2] sm:$0xff]
      %v105 = vld [vmem:[%s2] sm:$0x1]
      %v107 = vperm.slane %v105, 0
      %v109 = vadd.f32 %v104, %v107
      %110 = vst [vmem:[#allocation3] sm:$0xff] %v109
    $region21: #{classifier_head.1} parent=1 // pred_fallthru
      _
    // Predicated region
    $region22: #{classifier_head.1} parent=1 // pred_check
      _
    $region23: #{classifier_head.1} parent=1 // pred_check_branch
      %112 = sbr.rel (0) target = $region25
    $region24: #{classifier_head.1} parent=1 // pred_region
      %114 = vsyncadd [#allocation4], 0
      %s116 = sshll.u32 [#allocation3], 4
      %s117 = int_to_ptr.vmem [resolvable:$true] %s116
      %s118 = sshll.u32 %s3, 4
      %s119 = int_to_ptr.hbm [resolvable:$true] %s118
      %121 = dma.vmem_to_hbm [thread:$0]  %s117, 128, %s119, [#allocation4]
    $region25: #{classifier_head.1} parent=1 // pred_fallthru
      _
    // Predicated region
    $region26: #{classifier_head.1} parent=1 // pred_check
      _
    $region27: #{classifier_head.1} parent=1 // pred_check_branch
      %123 = sbr.rel (0) target = $region29
    $region28: #{classifier_head.1} parent=1 // pred_region
      %125 = dma.done [#allocation4], 128
    $region29: #{classifier_head.1} parent=1 // pred_fallthru
      _
    %126 = vsyncpa [#allocation4], 1

</llo_original>
